<compile_context>
chip_gen: v7x
topology: tpu7x:2x2x1
jax: 0.10.0
libtpu: 0.0.40
codegen_flags: <defaults>
</compile_context>

<pallas_src>
import functools

import jax
import jax.numpy as jnp
from jax import lax
from jax.experimental import pallas as pl
from jax.experimental.pallas import tpu as pltpu

NEG_SLOPE = 0.2                    # PyG GATConv default negative_slope
BIG_NEG = -1e30                    # additive mask value; softmax state kept in f32
LANE = 128
VMEM_LIMIT = 48 * 1024 * 1024      # leaves headroom on v7x (64 MiB physical / TC)


def _round_up(x, m):
    return (x + m - 1) // m * m


def _largest_tile(total, cap):
    """Largest multiple of LANE that divides `total` and is <= cap."""
    best, t = LANE, LANE
    while t <= min(cap, total):
        if total % t == 0:
            best = t
        t += LANE
    return best


def _pick_tiles(n):
    """(td, ts, np_pad): lane-aligned tiles dividing np_pad, with bounded padding.

    ts (src tile) is the largest candidate <= 2048 whose node padding inflates the
    O(N^2) attention work by <= ~12.5%; td (dst tile, also the pass-1 node tile)
    is the largest 128-multiple divisor of np_pad <= 1024.  Large tiles amortize
    the ~0.35us/step grid overhead and cut xp re-streaming (read np_pad/td times).
    """
    np128 = _round_up(n, LANE)
    ts, np_pad = LANE, np128
    for cand in range(LANE, min(2048, np128) + 1, LANE):
        np_c = _round_up(np128, cand)
        if 8 * np_c * np_c <= 9 * np128 * np128:      # <= 12.5% extra O(N^2) work
            ts, np_pad = cand, np_c
    td = _largest_tile(np_pad, 1024)
    # v7x has 2 TensorCores: keep >= 2 steps on the 'parallel' dst axis when possible.
    if np_pad // td < 2 and np_pad >= 2 * LANE:
        td = _largest_tile(np_pad, np_pad // 2)
    return td, ts, np_pad


# ---------------------------------------------------------------------------
# Pass 1: projection + source attention coefficients (lane-dense outputs only).
# ---------------------------------------------------------------------------
def _proj_kernel(x_ref, w_ref, asrc_blk_ref, xp_ref, asrcT_ref):
    # [tn, Fp](bf16) @ [Fp, hcp](bf16) -> f32 accumulate on the MXU.
    xp = jnp.dot(x_ref[...], w_ref[...], preferred_element_type=jnp.float32)
    xp_ref[...] = xp.astype(xp_ref.dtype)                      # bf16 out
    # alpha_src for all heads at once, head-major [H, tn] (lane-dense store).
    asrcT_ref[...] = lax.dot_general(
        asrc_blk_ref[...], xp,
        dimension_numbers=(((1,), (1,)), ((), ())),
        preferred_element_type=jnp.float32)


def _project(x_bf16, w_bf16, asrc_blk, *, heads, tile_n):
    np_pad, fp = x_bf16.shape
    hcp = w_bf16.shape[1]
    grid = (np_pad // tile_n,)
    cost = pl.CostEstimate(
        flops=int(2 * np_pad * fp * hcp + 2 * np_pad * hcp * heads),
        transcendentals=0,
        bytes_accessed=int(2 * np_pad * fp + 2 * fp * hcp
                           + 2 * np_pad * hcp + 4 * heads * np_pad),
    )
    return pl.pallas_call(
        _proj_kernel,
        out_shape=(jax.ShapeDtypeStruct((np_pad, hcp), jnp.bfloat16),
                   jax.ShapeDtypeStruct((heads, np_pad), jnp.float32)),
        grid_spec=pltpu.PrefetchScalarGridSpec(
            num_scalar_prefetch=0,
            grid=grid,
            in_specs=[
                pl.BlockSpec((tile_n, fp), lambda i: (i, 0)),
                pl.BlockSpec((fp, hcp), lambda i: (0, 0)),
                pl.BlockSpec((heads, hcp), lambda i: (0, 0)),
            ],
            out_specs=(
                pl.BlockSpec((tile_n, hcp), lambda i: (i, 0)),
                pl.BlockSpec((heads, tile_n), lambda i: (0, i)),
            ),
        ),
        compiler_params=pltpu.CompilerParams(
            dimension_semantics=("parallel",),
            vmem_limit_bytes=VMEM_LIMIT),
        cost_estimate=cost,
    )(x_bf16, w_bf16, asrc_blk)


# ---------------------------------------------------------------------------
# Pass 2: flash-style masked attention + aggregation.
# ---------------------------------------------------------------------------
def _attn_kernel(adj_ref, xps_ref, xpd_ref, asrcT_ref, adstm_ref, bias_ref,
                 out_ref, m_scr, l_scr, adst_scr, acc_scr,
                 *, heads, c, hcp, concat, apply_elu):
    j = pl.program_id(1)

    @pl.when(j == 0)
    def _init():
        m_scr[...] = jnp.full(m_scr.shape, BIG_NEG, m_scr.dtype)
        l_scr[...] = jnp.zeros(l_scr.shape, l_scr.dtype)
        acc_scr[...] = jnp.zeros(acc_scr.shape, acc_scr.dtype)
        # alpha_dst for this dst tile (all heads) from the dst xp block:
        # avoids a narrow node-major pass-1 output (masked partial stores).
        adst_scr[...] = jnp.dot(xpd_ref[...], adstm_ref[...],
                                preferred_element_type=jnp.float32)

    # Head-invariant masking work, hoisted out of the head loop.
    mask_add = jnp.where(adj_ref[...] != 0,
                         jnp.float32(0.0), jnp.float32(BIG_NEG))   # [td, ts]
    xp = xps_ref[...]                                              # [ts, hcp] bf16

    for h in range(heads):                      # tiny static head count -> unrolled
        a_dst = adst_scr[:, h:h + 1]            # [td, 1] f32
        a_src = asrcT_ref[h:h + 1, :]           # [1, ts] f32
        e = a_dst + a_src                       # [td, ts]
        e = jnp.where(e > 0, e, NEG_SLOPE * e) + mask_add   # leaky_relu + edge mask

        m_old = m_scr[:, h:h + 1]
        m_new = jnp.maximum(m_old, jnp.max(e, axis=1, keepdims=True))
        # Non-edges sit at ~-1e30 so exp underflows to exactly 0 once m_new is
        # finite; rows with no edge seen yet accumulate garbage that is flushed
        # by scale = exp(-1e30 - finite) = 0 when the (guaranteed) self-loop
        # edge arrives, so no explicit re-mask multiply/select is needed.
        p = jnp.exp(e - m_new)                  # [td, ts] f32
        scale = jnp.exp(m_old - m_new)          # [td, 1]

        l_scr[:, h:h + 1] = (scale * l_scr[:, h:h + 1]
                             + jnp.sum(p, axis=1, keepdims=True))
        sl = slice(h * hcp, (h + 1) * hcp)      # lane-aligned 128-multiple slice
        acc_scr[:, sl] = scale * acc_scr[:, sl] + jnp.dot(
            p.astype(xp.dtype), xp, preferred_element_type=jnp.float32)
        m_scr[:, h:h + 1] = m_new

    @pl.when(j == pl.num_programs(1) - 1)
    def _finalize():
        bias = bias_ref[...]                    # [1, hcp]
        if concat:
            # Combine per-head full-width accumulators with lane masks so every
            # slice stays 128-aligned (exact division: once per dst tile).
            lane = lax.broadcasted_iota(jnp.int32, (1, hcp), 1)
            out = jnp.zeros((out_ref.shape[0], hcp), jnp.float32)
            for h in range(heads):
                inv_l = 1.0 / l_scr[:, h:h + 1]
                contrib = acc_scr[:, h * hcp:(h + 1) * hcp] * inv_l
                head_mask = (lane >= h * c) & (lane < (h + 1) * c)
                out = out + jnp.where(head_mask, contrib, 0.0)
        else:
            # Mean over heads; the module only uses heads == 1 here.
            # TODO(synk): multi-head mean (concat=False, heads>1) would need a
            # lane roll to align per-head channels; not required by AuthorGAT.
            out = acc_scr[:, 0:hcp] * (1.0 / l_scr[:, 0:1])
        out = out + bias
        if apply_elu:
            out = jnp.where(out > 0, out, jnp.exp(jnp.minimum(out, 0.0)) - 1.0)
        out_ref[...] = out.astype(out_ref.dtype)


def gat_conv(x_bf16, w_bf16, asrc_blk, adst_mat_bf16, bias_pad, adj_i8, *,
             heads, c, hcp, concat, apply_elu, out_dtype, td, ts):
    """One GATConv layer (projection pass + tiled attention pass). Padded shapes in/out."""
    assert concat or heads == 1, "mean aggregation only implemented for heads == 1"
    np_pad = adj_i8.shape[0]

    # Bound the per-step VMEM footprint (mainly the f32 flash accumulator).
    while td > LANE and td * heads * hcp * 4 > 16 * 1024 * 1024:
        td = _largest_tile(np_pad, td - LANE)

    xp, asrcT = _project(x_bf16, w_bf16, asrc_blk, heads=heads, tile_n=td)

    grid = (np_pad // td, np_pad // ts)                  # (dst tiles, src tiles)
    kernel = functools.partial(_attn_kernel, heads=heads, c=c, hcp=hcp,
                               concat=concat, apply_elu=apply_elu)
    out_bytes = 2 if out_dtype == jnp.bfloat16 else 4
    cost = pl.CostEstimate(
        flops=int(2 * heads * np_pad * np_pad * hcp + 9 * heads * np_pad * np_pad
                  + 2 * grid[0] * td * hcp * heads),
        transcendentals=int((heads + 1) * np_pad * np_pad),
        bytes_accessed=int(np_pad * np_pad                      # int8 adjacency
                           + 2 * grid[0] * np_pad * hcp         # xp (src) re-reads
                           + 2 * np_pad * hcp                   # xp (dst)
                           + out_bytes * np_pad * hcp),
    )
    return pl.pallas_call(
        kernel,
        out_shape=jax.ShapeDtypeStruct((np_pad, hcp), out_dtype),
        grid_spec=pltpu.PrefetchScalarGridSpec(
            num_scalar_prefetch=0,
            grid=grid,
            in_specs=[
                pl.BlockSpec((td, ts), lambda i, j: (i, j)),        # adj[dst, src] int8
                pl.BlockSpec((ts, hcp), lambda i, j: (j, 0)),       # xp (src values)
                pl.BlockSpec((td, hcp), lambda i, j: (i, 0)),       # xp (dst, for alpha_dst)
                pl.BlockSpec((heads, ts), lambda i, j: (0, j)),     # alpha_src, head-major
                pl.BlockSpec((hcp, heads), lambda i, j: (0, 0)),    # att_dst block matrix
                pl.BlockSpec((1, hcp), lambda i, j: (0, 0)),        # bias
            ],
            out_specs=pl.BlockSpec((td, hcp), lambda i, j: (i, 0)),
            scratch_shapes=[
                pltpu.VMEM((td, heads), jnp.float32),        # running max m
                pltpu.VMEM((td, heads), jnp.float32),        # running denom l
                pltpu.VMEM((td, heads), jnp.float32),        # alpha_dst (per dst tile)
                pltpu.VMEM((td, heads * hcp), jnp.float32),  # per-head accumulators
            ],
        ),
        compiler_params=pltpu.CompilerParams(
            dimension_semantics=("parallel", "arbitrary"),
            vmem_limit_bytes=VMEM_LIMIT),
        cost_estimate=cost,
    )(adj_i8, xp, xp, asrcT, adst_mat_bf16, bias_pad)


class AuthorGATPallas:
    """Pallas AuthorGAT: conv1 (H heads, concat) -> ELU -> conv2 (1 head, mean)."""

    def __init__(self, in_channels, hidden_channels, out_channels, heads, key):
        ks = jax.random.split(key, 6)

        def glorot(k, shape):
            fan_in, fan_out = shape[-2], shape[-1]
            lim = (6.0 / (fan_in + fan_out)) ** 0.5
            return jax.random.uniform(k, shape, jnp.float32, -lim, lim)

        self.heads = heads
        self.hidden = hidden_channels
        self.out_channels = out_channels
        self.in_channels = in_channels

        # Raw parameters (PyG GATConv layout: W columns are head-major contiguous).
        w1 = glorot(ks[0], (in_channels, heads * hidden_channels))
        att_src1 = glorot(ks[1], (heads, hidden_channels))
        att_dst1 = glorot(ks[2], (heads, hidden_channels))
        w2 = glorot(ks[3], (heads * hidden_channels, out_channels))
        att_src2 = glorot(ks[4], (1, out_channels))
        att_dst2 = glorot(ks[5], (1, out_channels))

        # Packed (contiguous-head) channel widths, padded jointly to 128 lanes.
        self.fin_p = _round_up(in_channels, LANE)
        self.hc1 = heads * hidden_channels
        self.hcp1 = _round_up(self.hc1, LANE)                 # layer-1 width (e.g. 128)
        self.hcp2 = _round_up(out_channels, LANE)             # layer-2 width (heads=1)

        def pad2(a, shape):
            return jnp.zeros(shape, jnp.float32).at[:a.shape[0], :a.shape[1]].set(a)

        # Layer 1 padded params.
        self.w1_p = pad2(w1, (self.fin_p, self.hcp1)).astype(jnp.bfloat16)
        self.asrc_blk1, self.adst_mat1 = self._pack_att(att_src1, att_dst1,
                                                        heads, hidden_channels, self.hcp1)
        self.b1_p = jnp.zeros((1, self.hcp1), jnp.float32)

        # Layer 2 padded params (input is layer-1's packed bf16 output).
        self.w2_p = pad2(w2, (self.hcp1, self.hcp2)).astype(jnp.bfloat16)
        self.asrc_blk2, self.adst_mat2 = self._pack_att(att_src2, att_dst2,
                                                        1, out_channels, self.hcp2)
        self.b2_p = jnp.zeros((1, self.hcp2), jnp.float32)

    @staticmethod
    def _pack_att(att_src, att_dst, heads, c, hcp):
        """Block matrices for packed heads: src rows [H, hcp] (f32), dst cols [hcp, H] (bf16)."""
        asrc_blk = jnp.zeros((heads, hcp), jnp.float32)
        adst_mat = jnp.zeros((hcp, heads), jnp.float32)
        for h in range(heads):
            asrc_blk = asrc_blk.at[h, h * c:(h + 1) * c].set(att_src[h])
            adst_mat = adst_mat.at[h * c:(h + 1) * c, h].set(att_dst[h])
        return asrc_blk, adst_mat.astype(jnp.bfloat16)

    @staticmethod
    def build_adj(edge_index, num_nodes):
        """Dense int8 adjacency adj[dst, src] with self-loops on every (incl. padded) node.

        Built directly in int8 (no f32 eye/maximum/cast passes).  For a static
        graph, call this once and pass the result to __call__ to cache it.
        """
        _, _, np_pad = _pick_tiles(num_nodes)
        adj = jnp.zeros((np_pad, np_pad), jnp.int8)
        adj = adj.at[edge_index[1], edge_index[0]].set(1)
        diag = jnp.arange(np_pad)
        return adj.at[diag, diag].set(1)

    def __call__(self, x, edge_index, adj=None):
        n = x.shape[0]
        td, ts, np_pad = _pick_tiles(n)

        if adj is None:
            adj = self.build_adj(edge_index, n)

        # Pad node and feature dims with zeros; dropout(x) is identity in eval mode.
        x_p = jnp.zeros((np_pad, self.fin_p), jnp.bfloat16)
        x_p = x_p.at[:n, :self.in_channels].set(x.astype(jnp.bfloat16))

        h = gat_conv(x_p, self.w1_p, self.asrc_blk1, self.adst_mat1, self.b1_p, adj,
                     heads=self.heads, c=self.hidden, hcp=self.hcp1,
                     concat=True, apply_elu=True, out_dtype=jnp.bfloat16,
                     td=td, ts=ts)
        out = gat_conv(h, self.w2_p, self.asrc_blk2, self.adst_mat2, self.b2_p, adj,
                       heads=1, c=self.out_channels, hcp=self.hcp2,
                       concat=False, apply_elu=False, out_dtype=jnp.float32,
                       td=td, ts=ts)
        return out[:n, :self.out_channels]


if __name__ == "__main__":
    key = jax.random.PRNGKey(0)
    k_x, k_p = jax.random.split(key)

    N, IN_C, HID, OUT_C, HEADS = 16, 8, 8, 4, 2
    x = jax.random.normal(k_x, (N, IN_C), jnp.float32)

    # Deterministic bidirectional ring graph: edge_index[0]=src, edge_index[1]=dst.
    src = jnp.arange(N, dtype=jnp.int32)
    dst = jnp.roll(src, -1)
    edge_index = jnp.stack([jnp.concatenate([src, dst]),
                            jnp.concatenate([dst, src])], axis=0)   # [2, 2N]

    model = AuthorGATPallas(IN_C, HID, OUT_C, HEADS, k_p)
    out = jax.block_until_ready(model(x, edge_index))

    assert out.shape == (N, OUT_C), out.shape
    assert bool(jnp.all(jnp.isfinite(out)))
    print("KERNEL_OK")
</pallas_src>

<mosaic_0001>
module attributes {stable_mosaic.version = 11 : i64} {
  func.func @_proj_kernel(%arg0: i32, %arg1: memref<128x128xbf16, #tpu.memory_space<vmem>>, %arg2: memref<128x128xbf16, #tpu.memory_space<vmem>>, %arg3: memref<2x128xf32, #tpu.memory_space<vmem>>, %arg4: memref<128x128xbf16, #tpu.memory_space<vmem>>, %arg5: memref<2x128xf32, #tpu.memory_space<vmem>>) attributes {dimension_semantics = [#tpu.dimension_semantics<parallel>], iteration_bounds = array<i64: 1>, scalar_prefetch = 0 : i64, scratch_operands = 0 : i64, tpu.core_type = #tpu.core_type<tc>, window_params = [{transform_indices = @transform_0, window_bounds = array<i64: 128, 128>}, {pipeline_mode = #tpu.pipeline_mode<synchronous>, transform_indices = @transform_1, window_bounds = array<i64: 128, 128>}, {pipeline_mode = #tpu.pipeline_mode<synchronous>, transform_indices = @transform_2, window_bounds = array<i64: 2, 128>}, {transform_indices = @transform_3, window_bounds = array<i64: 128, 128>}, {transform_indices = @transform_4, window_bounds = array<i64: 2, 128>}]} {
    %c0 = arith.constant 0 : index
    %c0_0 = arith.constant 0 : index
    %0 = vector.load %arg1[%c0, %c0_0] : memref<128x128xbf16, #tpu.memory_space<vmem>>, vector<128x128xbf16>
    %c0_1 = arith.constant 0 : index
    %c0_2 = arith.constant 0 : index
    %1 = vector.load %arg2[%c0_1, %c0_2] : memref<128x128xbf16, #tpu.memory_space<vmem>>, vector<128x128xbf16>
    %cst = arith.constant dense<0.000000e+00> : vector<128x128xf32>
    %2 = tpu.matmul %0, %1, %cst {dimension_numbers = #tpu.dot_dimension_numbers<[1], [0], [0], [1], [0, 0, 1, 1], [], []>} : vector<128x128xbf16>, vector<128x128xbf16>, vector<128x128xf32> -> vector<128x128xf32>
    %3 = arith.truncf %2 : vector<128x128xf32> to vector<128x128xbf16>
    %c0_3 = arith.constant 0 : index
    %c0_4 = arith.constant 0 : index
    %4 = vector.load %arg4[%c0_3, %c0_4] : memref<128x128xbf16, #tpu.memory_space<vmem>>, vector<128x128xbf16>
    tpu.vector_store %arg4[%c0_3, %c0_4], %3 {strides = array<i32>} : memref<128x128xbf16, #tpu.memory_space<vmem>>, vector<128x128xbf16>,
    %c0_5 = arith.constant 0 : index
    %c0_6 = arith.constant 0 : index
    %5 = vector.load %arg3[%c0_5, %c0_6] : memref<2x128xf32, #tpu.memory_space<vmem>>, vector<2x128xf32>
    %cst_7 = arith.constant dense<0.000000e+00> : vector<2x128xf32>
    %6 = tpu.matmul %5, %2, %cst_7 {dimension_numbers = #tpu.dot_dimension_numbers<[1], [1], [0], [0], [0, 0, 1, 0], [], []>} : vector<2x128xf32>, vector<128x128xf32>, vector<2x128xf32> -> vector<2x128xf32>
    %c0_8 = arith.constant 0 : index
    %c0_9 = arith.constant 0 : index
    %7 = vector.load %arg5[%c0_8, %c0_9] : memref<2x128xf32, #tpu.memory_space<vmem>>, vector<2x128xf32>
    tpu.vector_store %arg5[%c0_8, %c0_9], %6 {strides = array<i32>} : memref<2x128xf32, #tpu.memory_space<vmem>>, vector<2x128xf32>,
    return
  }
  func.func @transform_0(%arg0: i32) -> (i32, i32) {
    %c0_i32 = arith.constant 0 : i32
    %c0_i32_0 = arith.constant 0 : i32
    return %arg0, %c0_i32 : i32, i32
  }
  func.func @transform_1(%arg0: i32) -> (i32, i32) {
    %c0_i32 = arith.constant 0 : i32
    %c0_i32_0 = arith.constant 0 : i32
    %c0_i32_1 = arith.constant 0 : i32
    return %c0_i32, %c0_i32_0 : i32, i32
  }
  func.func @transform_2(%arg0: i32) -> (i32, i32) {
    %c0_i32 = arith.constant 0 : i32
    %c0_i32_0 = arith.constant 0 : i32
    %c0_i32_1 = arith.constant 0 : i32
    return %c0_i32, %c0_i32_0 : i32, i32
  }
  func.func @transform_3(%arg0: i32) -> (i32, i32) {
    %c0_i32 = arith.constant 0 : i32
    %c0_i32_0 = arith.constant 0 : i32
    return %arg0, %c0_i32 : i32, i32
  }
  func.func @transform_4(%arg0: i32) -> (i32, i32) {
    %c0_i32 = arith.constant 0 : i32
    %c0_i32_0 = arith.constant 0 : i32
    return %c0_i32, %arg0 : i32, i32
  }
}

</mosaic_0001>

<llo_original>
// kernel: tpu_custom_call.1
$region0: #{tpu_custom_call.1}
  #allocation0 [shape = 'u32[]', space=smem, size = 0x4, offset = 0x4, fixed_abs, tag = 'smem constant byte address 0x4 - core index']
  #allocation1 [shape = 'u32[144,128]{1,0:T(1,128)}', space=vmem, size = 0x12000, scoped, tag = 'internal scratch']
  %s0 = inlined_call_operand.hbm [shape: bf16[128,128], index: 0, kind: input, shape index: {}]
  %s1 = inlined_call_operand.hbm [shape: bf16[128,128], index: 1, kind: input, shape index: {}]
  %s2 = inlined_call_operand.vmem [shape: f32[2,128], index: 2, kind: input, shape index: {}]
  %s3 = inlined_call_operand.hbm [shape: bf16[128,128], index: 3, kind: output, shape index: {0}]
  %s4 = inlined_call_operand.hbm [shape: f32[2,128], index: 4, kind: output, shape index: {1}]
  %5 = xla_tuple %s3, %s4
  %s6 = sld [smem:[#allocation0]]
  $region38: #{tpu_custom_call.1} parent=0
    _
  %s8 = ssub.s32 1, %s6
  %s9 = scalar_select 0, %s8, %s6
  $region1: #{tpu_custom_call.1} parent=0
    #allocation2 [shape = 'u8[32768]{0}', space=vmem, size = 0x8000, scoped, tag = 'input window, operand 0, single buffered']
    #allocation3 [shape = 's32[1]{0}', space=sflag, size = 0x4, scoped, tag = 'scoped memory for tpu_custom_call.1']
    #allocation4 [shape = 's32[1]{0}', space=sflag, size = 0x4, scoped, tag = 'scoped memory for tpu_custom_call.1']
    #allocation5 [shape = 'u8[32768]{0}', space=vmem, size = 0x8000, scoped, tag = 'input window, operand 1, single buffered']
    #allocation6 [shape = 's32[1]{0}', space=sflag, size = 0x4, scoped, tag = 'scoped memory for tpu_custom_call.1']
    #allocation7 [shape = 'u8[32768]{0}', space=vmem, size = 0x8000, scoped, tag = 'output window, operand 0, single buffered']
    #allocation8 [shape = 'u8[1024]{0}', space=vmem, size = 0x400, scoped, tag = 'output window, operand 1, single buffered']
    #allocation9 [shape = 's32[1]{0}', space=sflag, size = 0x4, scoped, tag = 'scoped memory for tpu_custom_call.1']
    %10 = vsyncpa [#allocation3], 0
    %11 = vsyncpa [#allocation6], 0
    %12 = vsyncpa [#allocation4], 0
    %13 = vsyncpa [#allocation9], 0
    // Predicated region
    $region2: #{tpu_custom_call.1} parent=1 // pred_check
      _
    $region3: #{tpu_custom_call.1} parent=1 // pred_check_branch
      %15 = sbr.rel (0) target = $region5
    $region4: #{tpu_custom_call.1} parent=1 // pred_region
      %s17 = ssub.s32 1024, 1024
      %18 = vsyncadd [#allocation3], %s17
      %s19 = sshll.u32 [#allocation2], 4
      %s20 = int_to_ptr.vmem [resolvable:$true] %s19
      %25 = dma.hbm_to_vmem [thread:$0]  %s0, 1024, %s20, [#allocation3], 64, 64, 4
    $region5: #{tpu_custom_call.1} parent=1 // pred_fallthru
      _
    // Predicated region
    $region6: #{tpu_custom_call.1} parent=1 // pred_check
      _
    $region7: #{tpu_custom_call.1} parent=1 // pred_check_branch
      %27 = sbr.rel (0) target = $region9
    $region8: #{tpu_custom_call.1} parent=1 // pred_region
      %s29 = ssub.s32 1024, 1024
      %30 = vsyncadd [#allocation6], %s29
      %s31 = sshll.u32 [#allocation5], 4
      %s32 = int_to_ptr.vmem [resolvable:$true] %s31
      %37 = dma.hbm_to_vmem [thread:$0]  %s1, 1024, %s32, [#allocation6], 64, 64, 4
    $region9: #{tpu_custom_call.1} parent=1 // pred_fallthru
      _
    // Predicated region
    $region10: #{tpu_custom_call.1} parent=1 // pred_check
      _
    $region11: #{tpu_custom_call.1} parent=1 // pred_check_branch
      %39 = sbr.rel (0) target = $region13
    $region12: #{tpu_custom_call.1} parent=1 // pred_region
      _
    $region13: #{tpu_custom_call.1} parent=1 // pred_fallthru
      _
    // Predicated region
    $region14: #{tpu_custom_call.1} parent=1 // pred_check
      _
    $region15: #{tpu_custom_call.1} parent=1 // pred_check_branch
      %41 = sbr.rel (0) target = $region17
    $region16: #{tpu_custom_call.1} parent=1 // pred_region
      %42 = dma.done [#allocation3], 1024
    $region17: #{tpu_custom_call.1} parent=1 // pred_fallthru
      _
    // Predicated region
    $region18: #{tpu_custom_call.1} parent=1 // pred_check
      _
    $region19: #{tpu_custom_call.1} parent=1 // pred_check_branch
      %44 = sbr.rel (0) target = $region21
    $region20: #{tpu_custom_call.1} parent=1 // pred_region
      %45 = dma.done [#allocation6], 1024
    $region21: #{tpu_custom_call.1} parent=1 // pred_fallthru
      _
    %v47 = vld [vmem:[#allocation2] sm:$0xf]
    %v48 = vld [vmem:[#allocation2 + $0x4] sm:$0xf]
    %v49 = vld [vmem:[#allocation2 + $0x8] sm:$0xf]
    %v50 = vld [vmem:[#allocation2 + $0xc] sm:$0xf]
    %v51 = vld [vmem:[#allocation2 + $0x10] sm:$0xf]
    %v52 = vld [vmem:[#allocation2 + $0x14] sm:$0xf]
    %v53 = vld [vmem:[#allocation2 + $0x18] sm:$0xf]
    %v54 = vld [vmem:[#allocation2 + $0x1c] sm:$0xf]
    %v55 = vld [vmem:[#allocation2 + $0x20] sm:$0xf]
    %v56 = vld [vmem:[#allocation2 + $0x24] sm:$0xf]
    %v57 = vld [vmem:[#allocation2 + $0x28] sm:$0xf]
    %v58 = vld [vmem:[#allocation2 + $0x2c] sm:$0xf]
    %v59 = vld [vmem:[#allocation2 + $0x30] sm:$0xf]
    %v60 = vld [vmem:[#allocation2 + $0x34] sm:$0xf]
    %v61 = vld [vmem:[#allocation2 + $0x38] sm:$0xf]
    %v62 = vld [vmem:[#allocation2 + $0x3c] sm:$0xf]
    %v63 = vld [vmem:[#allocation5] sm:$0xf]
    %v64 = vld [vmem:[#allocation5 + $0x4] sm:$0xf]
    %v65 = vld [vmem:[#allocation5 + $0x8] sm:$0xf]
    %v66 = vld [vmem:[#allocation5 + $0xc] sm:$0xf]
    %v67 = vld [vmem:[#allocation5 + $0x10] sm:$0xf]
    %v68 = vld [vmem:[#allocation5 + $0x14] sm:$0xf]
    %v69 = vld [vmem:[#allocation5 + $0x18] sm:$0xf]
    %v70 = vld [vmem:[#allocation5 + $0x1c] sm:$0xf]
    %v71 = vld [vmem:[#allocation5 + $0x20] sm:$0xf]
    %v72 = vld [vmem:[#allocation5 + $0x24] sm:$0xf]
    %v73 = vld [vmem:[#allocation5 + $0x28] sm:$0xf]
    %v74 = vld [vmem:[#allocation5 + $0x2c] sm:$0xf]
    %v75 = vld [vmem:[#allocation5 + $0x30] sm:$0xf]
    %v76 = vld [vmem:[#allocation5 + $0x34] sm:$0xf]
    %v77 = vld [vmem:[#allocation5 + $0x38] sm:$0xf]
    %v78 = vld [vmem:[#allocation5 + $0x3c] sm:$0xf]
    %v95 = vunpack.c.l.b16 %v47
    %v96 = vunpack.c.l.b16 %v48
    %v97 = vunpack.c.l.b16 %v49
    %v98 = vunpack.c.l.b16 %v50
    %v99 = vunpack.c.l.b16 %v51
    %v100 = vunpack.c.l.b16 %v52
    %v101 = vunpack.c.l.b16 %v53
    %v102 = vunpack.c.l.b16 %v54
    %v103 = vunpack.c.l.b16 %v55
    %v104 = vunpack.c.l.b16 %v56
    %v105 = vunpack.c.l.b16 %v57
    %v106 = vunpack.c.l.b16 %v58
    %v107 = vunpack.c.l.b16 %v59
    %v108 = vunpack.c.l.b16 %v60
    %v109 = vunpack.c.l.b16 %v61
    %v110 = vunpack.c.l.b16 %v62
    %v111 = vpack.c.b16 %v96, %v95
    %v112 = vpack.c.b16 %v98, %v97
    %v113 = vpack.c.b16 %v100, %v99
    %v114 = vpack.c.b16 %v102, %v101
    %v115 = vpack.c.b16 %v104, %v103
    %v116 = vpack.c.b16 %v106, %v105
    %v117 = vpack.c.b16 %v108, %v107
    %v118 = vpack.c.b16 %v110, %v109
    %v143 = vunpack.c.l.b16 %v63
    %v144 = vunpack.c.l.b16 %v64
    %v145 = vunpack.c.l.b16 %v65
    %v146 = vunpack.c.l.b16 %v66
    %v147 = vunpack.c.l.b16 %v67
    %v148 = vunpack.c.l.b16 %v68
    %v149 = vunpack.c.l.b16 %v69
    %v150 = vunpack.c.l.b16 %v70
    %v151 = vunpack.c.l.b16 %v71
    %v152 = vunpack.c.l.b16 %v72
    %v153 = vunpack.c.l.b16 %v73
    %v154 = vunpack.c.l.b16 %v74
    %v155 = vunpack.c.l.b16 %v75
    %v156 = vunpack.c.l.b16 %v76
    %v157 = vunpack.c.l.b16 %v77
    %v158 = vunpack.c.l.b16 %v78
    %v159 = vpack.c.b16 %v144, %v143
    %v160 = vpack.c.b16 %v146, %v145
    %v161 = vpack.c.b16 %v148, %v147
    %v162 = vpack.c.b16 %v150, %v149
    %v163 = vpack.c.b16 %v152, %v151
    %v164 = vpack.c.b16 %v154, %v153
    %v165 = vpack.c.b16 %v156, %v155
    %v166 = vpack.c.b16 %v158, %v157
    %175 = vmatprep.subr.bf16.mxu0 0
    %176 = vmatpush1.bf16.msra.mxu0 %v159
    %177 = vmatprep.subr.bf16.mxu0 0
    %178 = vmatpush1.bf16.msra.mxu0 %v160
    %179 = vmatprep.subr.bf16.mxu0 0
    %180 = vmatpush1.bf16.msra.mxu0 %v161
    %181 = vmatprep.subr.bf16.mxu0 0
    %182 = vmatpush1.bf16.msra.mxu0 %v162
    %183 = vmatprep.subr.bf16.mxu0 0
    %184 = vmatpush1.bf16.msra.mxu0 %v163
    %185 = vmatprep.subr.bf16.mxu0 0
    %186 = vmatpush1.bf16.msra.mxu0 %v164
    %187 = vmatprep.subr.bf16.mxu0 0
    %188 = vmatpush1.bf16.msra.mxu0 %v165
    %189 = vmatprep.subr.bf16.mxu0 0
    %190 = vmatpush1.bf16.msra.mxu0 %v166
    %191 = vmatprep.subr.bf16.mxu0 0
    %192 = vmatpush1.bf16.msra.mxu0 0
    %193 = vmatprep.subr.bf16.mxu0 0
    %194 = vmatpush1.bf16.msra.mxu0 0
    %195 = vmatprep.subr.bf16.mxu0 0
    %196 = vmatpush1.bf16.msra.mxu0 0
    %197 = vmatprep.subr.bf16.mxu0 0
    %198 = vmatpush1.bf16.msra.mxu0 0
    %199 = vmatprep.subr.bf16.mxu0 0
    %200 = vmatpush1.bf16.msra.mxu0 0
    %201 = vmatprep.subr.bf16.mxu0 0
    %202 = vmatpush1.bf16.msra.mxu0 0
    %203 = vmatprep.subr.bf16.mxu0 0
    %204 = vmatpush1.bf16.msra.mxu0 0
    %205 = vmatprep.subr.bf16.mxu0 0
    %206 = vmatpush1.bf16.msra.mxu0 0
    %207 = vmatprep.mubr.bf16.mxu0 0
    %208 = vmatmul.mubr.bf16.gmra.mrb[0].mxu0 %v111
    %v209 = vpop.f32.mrb[0].mxu0
    %v210 = vadd.f32 0.0, %v209
    %v211 = vpop.f32.mrb[0].mxu0
    %v212 = vpop.f32.mrb[0].mxu0
    %v213 = vadd.f32 0.0, %v212
    %v214 = vpop.f32.mrb[0].mxu0
    %215 = vmatprep.mubr.bf16.mxu0 0
    %216 = vmatmul.mubr.bf16.gmra.mrb[0].mxu0 %v112
    %v217 = vpop.f32.mrb[0].mxu0
    %v218 = vadd.f32 0.0, %v217
    %v219 = vpop.f32.mrb[0].mxu0
    %v220 = vpop.f32.mrb[0].mxu0
    %v221 = vadd.f32 0.0, %v220
    %v222 = vpop.f32.mrb[0].mxu0
    %223 = vmatprep.mubr.bf16.mxu0 0
    %224 = vmatmul.mubr.bf16.gmra.mrb[0].mxu0 %v113
    %v225 = vpop.f32.mrb[0].mxu0
    %v226 = vadd.f32 0.0, %v225
    %v227 = vpop.f32.mrb[0].mxu0
    %v228 = vpop.f32.mrb[0].mxu0
    %v229 = vadd.f32 0.0, %v228
    %v230 = vpop.f32.mrb[0].mxu0
    %231 = vmatprep.mubr.bf16.mxu0 0
    %232 = vmatmul.mubr.bf16.gmra.mrb[0].mxu0 %v114
    %v233 = vpop.f32.mrb[0].mxu0
    %v234 = vadd.f32 0.0, %v233
    %v235 = vpop.f32.mrb[0].mxu0
    %v236 = vpop.f32.mrb[0].mxu0
    %v237 = vadd.f32 0.0, %v236
    %v238 = vpop.f32.mrb[0].mxu0
    %239 = vmatprep.mubr.bf16.mxu0 0
    %240 = vmatmul.mubr.bf16.gmra.mrb[0].mxu0 %v115
    %v241 = vpop.f32.mrb[0].mxu0
    %v242 = vadd.f32 0.0, %v241
    %v243 = vpop.f32.mrb[0].mxu0
    %v244 = vpop.f32.mrb[0].mxu0
    %v245 = vadd.f32 0.0, %v244
    %v246 = vpop.f32.mrb[0].mxu0
    %247 = vmatprep.mubr.bf16.mxu0 0
    %248 = vmatmul.mubr.bf16.gmra.mrb[0].mxu0 %v116
    %v249 = vpop.f32.mrb[0].mxu0
    %v250 = vadd.f32 0.0, %v249
    %v251 = vpop.f32.mrb[0].mxu0
    %v252 = vpop.f32.mrb[0].mxu0
    %v253 = vadd.f32 0.0, %v252
    %v254 = vpop.f32.mrb[0].mxu0
    %255 = vmatprep.mubr.bf16.mxu0 0
    %256 = vmatmul.mubr.bf16.gmra.mrb[0].mxu0 %v117
    %v257 = vpop.f32.mrb[0].mxu0
    %v258 = vadd.f32 0.0, %v257
    %v259 = vpop.f32.mrb[0].mxu0
    %v260 = vpop.f32.mrb[0].mxu0
    %v261 = vadd.f32 0.0, %v260
    %v262 = vpop.f32.mrb[0].mxu0
    %263 = vmatprep.mubr.bf16.mxu0 0
    %264 = vmatmul.mubr.bf16.gmra.mrb[0].mxu0 %v118
    %v265 = vpop.f32.mrb[0].mxu0
    %v266 = vadd.f32 0.0, %v265
    %v267 = vpop.f32.mrb[0].mxu0
    %v268 = vpop.f32.mrb[0].mxu0
    %v269 = vadd.f32 0.0, %v268
    %v270 = vpop.f32.mrb[0].mxu0
    %271 = vdwg.mxu0
    %v272 = vpack.c.bf16 %v213, %v210
    %v273 = vpack.c.bf16 %v221, %v218
    %v274 = vpack.c.bf16 %v229, %v226
    %v275 = vpack.c.bf16 %v237, %v234
    %v276 = vpack.c.bf16 %v245, %v242
    %v277 = vpack.c.bf16 %v253, %v250
    %v278 = vpack.c.bf16 %v261, %v258
    %v279 = vpack.c.bf16 %v269, %v266
    %v288 = vunpack.c.l.b16 %v272
    %v289 = vunpack.c.h.b16 %v272
    %v290 = vunpack.c.l.b16 %v273
    %v291 = vunpack.c.h.b16 %v273
    %v292 = vunpack.c.l.b16 %v274
    %v293 = vunpack.c.h.b16 %v274
    %v294 = vunpack.c.l.b16 %v275
    %v295 = vunpack.c.h.b16 %v275
    %v296 = vunpack.c.l.b16 %v276
    %v297 = vunpack.c.h.b16 %v276
    %v298 = vunpack.c.l.b16 %v277
    %v299 = vunpack.c.h.b16 %v277
    %v300 = vunpack.c.l.b16 %v278
    %v301 = vunpack.c.h.b16 %v278
    %v302 = vunpack.c.l.b16 %v279
    %v303 = vunpack.c.h.b16 %v279
    %v304 = vpack.c.b16 %v288, %v288
    %v305 = vpack.c.b16 %v289, %v289
    %v306 = vpack.c.b16 %v290, %v290
    %v307 = vpack.c.b16 %v291, %v291
    %v308 = vpack.c.b16 %v292, %v292
    %v309 = vpack.c.b16 %v293, %v293
    %v310 = vpack.c.b16 %v294, %v294
    %v311 = vpack.c.b16 %v295, %v295
    %v312 = vpack.c.b16 %v296, %v296
    %v313 = vpack.c.b16 %v297, %v297
    %v314 = vpack.c.b16 %v298, %v298
    %v315 = vpack.c.b16 %v299, %v299
    %v316 = vpack.c.b16 %v300, %v300
    %v317 = vpack.c.b16 %v301, %v301
    %v318 = vpack.c.b16 %v302, %v302
    %v319 = vpack.c.b16 %v303, %v303
    %336 = vst [vmem:[#allocation7] sm:$0xf] %v304
    %337 = vst [vmem:[#allocation7 + $0x4] sm:$0xf] %v305
    %338 = vst [vmem:[#allocation7 + $0x8] sm:$0xf] %v306
    %339 = vst [vmem:[#allocation7 + $0xc] sm:$0xf] %v307
    %340 = vst [vmem:[#allocation7 + $0x10] sm:$0xf] %v308
    %341 = vst [vmem:[#allocation7 + $0x14] sm:$0xf] %v309
    %342 = vst [vmem:[#allocation7 + $0x18] sm:$0xf] %v310
    %343 = vst [vmem:[#allocation7 + $0x1c] sm:$0xf] %v311
    %344 = vst [vmem:[#allocation7 + $0x20] sm:$0xf] %v312
    %345 = vst [vmem:[#allocation7 + $0x24] sm:$0xf] %v313
    %346 = vst [vmem:[#allocation7 + $0x28] sm:$0xf] %v314
    %347 = vst [vmem:[#allocation7 + $0x2c] sm:$0xf] %v315
    %348 = vst [vmem:[#allocation7 + $0x30] sm:$0xf] %v316
    %349 = vst [vmem:[#allocation7 + $0x34] sm:$0xf] %v317
    %350 = vst [vmem:[#allocation7 + $0x38] sm:$0xf] %v318
    %351 = vst [vmem:[#allocation7 + $0x3c] sm:$0xf] %v319
    %v352 = vld [vmem:[%s2] sm:$0x3]
    %353 = vmatprep.subr.mxu0 0.0
    %354 = vmatpush1.xpose.msra.mxu0 %v210
    %355 = vmatprep.subr.mxu0 0.0
    %356 = vmatpush1.xpose.msra.mxu0 %v213
    %357 = vmatprep.subr.mxu0 0.0
    %358 = vmatpush1.xpose.msra.mxu0 %v218
    %359 = vmatprep.subr.mxu0 0.0
    %360 = vmatpush1.xpose.msra.mxu0 %v221
    %361 = vmatprep.subr.mxu0 0.0
    %362 = vmatpush1.xpose.msra.mxu0 %v226
    %363 = vmatprep.subr.mxu0 0.0
    %364 = vmatpush1.xpose.msra.mxu0 %v229
    %365 = vmatprep.subr.mxu0 0.0
    %366 = vmatpush1.xpose.msra.mxu0 %v234
    %367 = vmatprep.subr.mxu0 0.0
    %368 = vmatpush1.xpose.msra.mxu0 %v237
    %369 = vmatprep.subr.mxu0 0.0
    %370 = vmatpush1.xpose.msra.mxu0 %v242
    %371 = vmatprep.subr.mxu0 0.0
    %372 = vmatpush1.xpose.msra.mxu0 %v245
    %373 = vmatprep.subr.mxu0 0.0
    %374 = vmatpush1.xpose.msra.mxu0 %v250
    %375 = vmatprep.subr.mxu0 0.0
    %376 = vmatpush1.xpose.msra.mxu0 %v253
    %377 = vmatprep.subr.mxu0 0.0
    %378 = vmatpush1.xpose.msra.mxu0 %v258
    %379 = vmatprep.subr.mxu0 0.0
    %380 = vmatpush1.xpose.msra.mxu0 %v261
    %381 = vmatprep.subr.mxu0 0.0
    %382 = vmatpush1.xpose.msra.mxu0 %v266
    %383 = vmatprep.subr.mxu0 0.0
    %384 = vmatpush1.xpose.msra.mxu0 %v269
    %385 = vmatprep.subr.mxu0 0.0
    %386 = vmatpush1.xpose.msra.mxu0 0.0
    %387 = vmatprep.subr.mxu0 0.0
    %388 = vmatpush1.xpose.msra.mxu0 0.0
    %389 = vmatprep.subr.mxu0 0.0
    %390 = vmatpush1.xpose.msra.mxu0 0.0
    %391 = vmatprep.subr.mxu0 0.0
    %392 = vmatpush1.xpose.msra.mxu0 0.0
    %393 = vmatprep.subr.mxu0 0.0
    %394 = vmatpush1.xpose.msra.mxu0 0.0
    %395 = vmatprep.subr.mxu0 0.0
    %396 = vmatpush1.xpose.msra.mxu0 0.0
    %397 = vmatprep.subr.mxu0 0.0
    %398 = vmatpush1.xpose.msra.mxu0 0.0
    %399 = vmatprep.subr.mxu0 0.0
    %400 = vmatpush1.xpose.msra.mxu0 0.0
    %401 = vmatprep.subr.mxu0 0.0
    %402 = vmatpush1.xpose.msra.mxu0 0.0
    %403 = vmatprep.subr.mxu0 0.0
    %404 = vmatpush1.xpose.msra.mxu0 0.0
    %405 = vmatprep.subr.mxu0 0.0
    %406 = vmatpush1.xpose.msra.mxu0 0.0
    %407 = vmatprep.subr.mxu0 0.0
    %408 = vmatpush1.xpose.msra.mxu0 0.0
    %409 = vmatprep.subr.mxu0 0.0
    %410 = vmatpush1.xpose.msra.mxu0 0.0
    %411 = vmatprep.subr.mxu0 0.0
    %412 = vmatpush1.xpose.msra.mxu0 0.0
    %413 = vmatprep.subr.mxu0 0.0
    %414 = vmatpush1.xpose.msra.mxu0 0.0
    %415 = vmatprep.subr.mxu0 0.0
    %416 = vmatpush1.xpose.msra.mxu0 0.0
    %417 = vmatprep.mubr.f32.mxu0 0.0
    %418 = vmatmul.mubr.f32.gmra.mrb[0].mxu0 %v352
    %v419 = vpop.f32.mrb[0].mxu0
    %v420 = vadd.f32 0.0, %v419
    %v421 = vpop.f32.mrb[0].mxu0
    %422 = vdwg.mxu0
    %423 = vst [vmem:[#allocation8] sm:$0x3] %v420
    // Predicated region
    $region22: #{tpu_custom_call.1} parent=1 // pred_check
      _
    $region23: #{tpu_custom_call.1} parent=1 // pred_check_branch
      %425 = sbr.rel (0) target = $region25
    $region24: #{tpu_custom_call.1} parent=1 // pred_region
      %s427 = ssub.s32 1024, 1024
      %428 = vsyncadd [#allocation4], %s427
      %s429 = sshll.u32 [#allocation7], 4
      %s430 = int_to_ptr.vmem [resolvable:$true] %s429
      %435 = dma.vmem_to_hbm [thread:$0]  %s430, 1024, %s3, [#allocation4], 64, 64, 4
    $region25: #{tpu_custom_call.1} parent=1 // pred_fallthru
      _
    // Predicated region
    $region26: #{tpu_custom_call.1} parent=1 // pred_check
      _
    $region27: #{tpu_custom_call.1} parent=1 // pred_check_branch
      %437 = sbr.rel (0) target = $region29
    $region28: #{tpu_custom_call.1} parent=1 // pred_region
      %s439 = ssub.s32 32, 32
      %440 = vsyncadd [#allocation9], %s439
      %s442 = sshll.u32 [#allocation8], 4
      %s443 = int_to_ptr.vmem [resolvable:$true] %s442
      %445 = dma.vmem_to_hbm [thread:$0]  %s443, 32, %s4, [#allocation9]
    $region29: #{tpu_custom_call.1} parent=1 // pred_fallthru
      _
    // Predicated region
    $region30: #{tpu_custom_call.1} parent=1 // pred_check
      _
    $region31: #{tpu_custom_call.1} parent=1 // pred_check_branch
      %447 = sbr.rel (0) target = $region33
    $region32: #{tpu_custom_call.1} parent=1 // pred_region
      %448 = dma.done [#allocation4], 1024
    $region33: #{tpu_custom_call.1} parent=1 // pred_fallthru
      _
    // Predicated region
    $region34: #{tpu_custom_call.1} parent=1 // pred_check
      _
    $region35: #{tpu_custom_call.1} parent=1 // pred_check_branch
      %450 = sbr.rel (0) target = $region37
    $region36: #{tpu_custom_call.1} parent=1 // pred_region
      %451 = dma.done [#allocation9], 32
    $region37: #{tpu_custom_call.1} parent=1 // pred_fallthru
      _
    %452 = vsyncpa [#allocation3], 1
    %453 = vsyncpa [#allocation6], 1
    %454 = vsyncpa [#allocation4], 1
    %455 = vsyncpa [#allocation9], 1

</llo_original>
